<compile_context>
chip_gen: v6e
topology: v6e:2x2x1
jax: 0.10.0
libtpu: 0.0.40
codegen_flags: <defaults>
</compile_context>

<pallas_src>
import jax
import jax.numpy as jnp
from jax.experimental import pallas as pl
from jax.experimental.pallas import tpu as pltpu


def _normalize_kernel(x_ref, scale_ref, bias_ref, o_ref):
    # x_ref:     (TR, TW)  tile of flattened image rows
    # scale_ref: (TR, 1)   per-row 1/std
    # bias_ref:  (TR, 1)   per-row -mean/std
    o_ref[...] = x_ref[...] * scale_ref[...] + bias_ref[...]


def _round_up(x: int, m: int) -> int:
    return ((x + m - 1) // m) * m


def normalize(x: jax.Array, mean: jax.Array, std: jax.Array) -> jax.Array:
    """x: (N, C, H, W); mean, std: (C,). Returns (N, C, H, W)."""
    N, C, H, W = x.shape
    NC, HW = N * C, H * W

    # Lane-dense 2D slab: one row per (n, c) image plane.
    x2d = x.reshape(NC, HW)

    # Fold normalization into one FMA: out = x * (1/std) + (-mean/std).
    scale = (1.0 / std).astype(x.dtype)
    bias = (-mean / std).astype(x.dtype)
    scale_rows = jnp.tile(scale, N).reshape(NC, 1)
    bias_rows = jnp.tile(bias, N).reshape(NC, 1)

    # Pad rows to a multiple of 8 (sublanes) and lanes to a multiple of 128
    # so every output store is lane-dense / unmasked.
    NC_pad = _round_up(NC, 8)
    HW_pad = _round_up(HW, 128)
    if NC_pad != NC or HW_pad != HW:
        x2d = jnp.pad(x2d, ((0, NC_pad - NC), (0, HW_pad - HW)))
    if NC_pad != NC:
        scale_rows = jnp.pad(
            scale_rows, ((0, NC_pad - NC), (0, 0)), constant_values=1
        )
        bias_rows = jnp.pad(bias_rows, ((0, NC_pad - NC), (0, 0)))

    # Fixed-size tiles (no degenerate whole-array fallback): ~2 MiB f32 max.
    TR = min(256, NC_pad)   # multiple of 8 by construction
    TW = min(2048, HW_pad)  # multiple of 128 by construction

    # Grid ordered (row tile i, hw tile j) with j innermost so the (TR, 1)
    # scale/bias blocks keep the same block index across the inner axis.
    grid = (pl.cdiv(NC_pad, TR), pl.cdiv(HW_pad, TW))

    out2d = pl.pallas_call(
        _normalize_kernel,
        out_shape=jax.ShapeDtypeStruct((NC_pad, HW_pad), x.dtype),
        grid_spec=pltpu.PrefetchScalarGridSpec(
            num_scalar_prefetch=0,
            grid=grid,
            in_specs=[
                pl.BlockSpec((TR, TW), lambda i, j: (i, j)),
                pl.BlockSpec((TR, 1), lambda i, j: (i, 0)),
                pl.BlockSpec((TR, 1), lambda i, j: (i, 0)),
            ],
            out_specs=pl.BlockSpec((TR, TW), lambda i, j: (i, j)),
        ),
        compiler_params=pltpu.CompilerParams(
            # Both axes are independent -> shard across v7x's 2 TensorCores;
            # harmless on single-TC v5e/v6e.
            dimension_semantics=("parallel", "parallel"),
            # Explicit cap: well above the ~8 MiB double-buffered footprint,
            # within every generation's scoped/physical VMEM.
            vmem_limit_bytes=32 << 20,
        ),
    )(x2d, scale_rows, bias_rows)

    return out2d[:NC, :HW].reshape(N, C, H, W)


def _reference(x, mean, std):
    return (x - mean[None, :, None, None]) / std[None, :, None, None]


if __name__ == "__main__":
    key = jax.random.PRNGKey(0)
    kx, km, ks, kx2 = jax.random.split(key, 4)

    # Aligned case (NC multiple of 8, HW multiple of 128).
    N, C, H, W = 2, 4, 16, 16
    x = jax.random.normal(kx, (N, C, H, W), dtype=jnp.float32)
    mean = jax.random.normal(km, (C,), dtype=jnp.float32)
    std = jax.random.uniform(ks, (C,), dtype=jnp.float32, minval=0.5, maxval=2.0)

    out = normalize(x, mean, std)
    jax.block_until_ready(out)
    ref = _reference(x, mean, std)
    assert out.shape == (N, C, H, W)
    assert jnp.allclose(out, ref, atol=1e-5, rtol=1e-5)

    # Unaligned case (NC=3 not a multiple of 8, HW=196 not a multiple of 128)
    # to exercise the padding / masking path.
    N2, C2, H2, W2 = 1, 3, 14, 14
    x2 = jax.random.normal(kx2, (N2, C2, H2, W2), dtype=jnp.float32)
    mean2 = mean[:C2]
    std2 = std[:C2]

    out2 = normalize(x2, mean2, std2)
    jax.block_until_ready(out2)
    ref2 = _reference(x2, mean2, std2)
    assert out2.shape == (N2, C2, H2, W2)
    assert jnp.allclose(out2, ref2, atol=1e-5, rtol=1e-5)

    print("KERNEL_OK")
</pallas_src>

<mosaic_0001>
module attributes {stable_mosaic.version = 11 : i64} {
  func.func @_normalize_kernel(%arg0: i32, %arg1: i32, %arg2: memref<8x256xf32, #tpu.memory_space<vmem>>, %arg3: memref<8x1xf32, #tpu.memory_space<vmem>>, %arg4: memref<8x1xf32, #tpu.memory_space<vmem>>, %arg5: memref<8x256xf32, #tpu.memory_space<vmem>>) attributes {dimension_semantics = [#tpu.dimension_semantics<parallel>, #tpu.dimension_semantics<parallel>], iteration_bounds = array<i64: 1, 1>, scalar_prefetch = 0 : i64, scratch_operands = 0 : i64, tpu.core_type = #tpu.core_type<tc>, window_params = [{transform_indices = @transform_0, window_bounds = array<i64: 8, 256>}, {transform_indices = @transform_1, window_bounds = array<i64: 8, 1>}, {transform_indices = @transform_2, window_bounds = array<i64: 8, 1>}, {transform_indices = @transform_3, window_bounds = array<i64: 8, 256>}]} {
    %c0 = arith.constant 0 : index
    %c0_0 = arith.constant 0 : index
    %0 = vector.load %arg2[%c0, %c0_0] : memref<8x256xf32, #tpu.memory_space<vmem>>, vector<8x256xf32>
    %c0_1 = arith.constant 0 : index
    %c0_2 = arith.constant 0 : index
    %1 = vector.load %arg3[%c0_1, %c0_2] : memref<8x1xf32, #tpu.memory_space<vmem>>, vector<8x1xf32>
    %2 = vector.broadcast %1 : vector<8x1xf32> to vector<8x256xf32>
    %3 = arith.mulf %0, %2 : vector<8x256xf32>
    %c0_3 = arith.constant 0 : index
    %c0_4 = arith.constant 0 : index
    %4 = vector.load %arg4[%c0_3, %c0_4] : memref<8x1xf32, #tpu.memory_space<vmem>>, vector<8x1xf32>
    %5 = vector.broadcast %4 : vector<8x1xf32> to vector<8x256xf32>
    %6 = arith.addf %3, %5 : vector<8x256xf32>
    %c0_5 = arith.constant 0 : index
    %c0_6 = arith.constant 0 : index
    %7 = vector.load %arg5[%c0_5, %c0_6] : memref<8x256xf32, #tpu.memory_space<vmem>>, vector<8x256xf32>
    tpu.vector_store %arg5[%c0_5, %c0_6], %6 {strides = array<i32>} : memref<8x256xf32, #tpu.memory_space<vmem>>, vector<8x256xf32>,
    return
  }
  func.func @transform_0(%arg0: i32, %arg1: i32) -> (i32, i32) {
    %c0_i32 = arith.constant 0 : i32
    return %arg0, %arg1 : i32, i32
  }
  func.func @transform_1(%arg0: i32, %arg1: i32) -> (i32, i32) {
    %c0_i32 = arith.constant 0 : i32
    %c0_i32_0 = arith.constant 0 : i32
    return %arg0, %c0_i32 : i32, i32
  }
  func.func @transform_2(%arg0: i32, %arg1: i32) -> (i32, i32) {
    %c0_i32 = arith.constant 0 : i32
    %c0_i32_0 = arith.constant 0 : i32
    return %arg0, %c0_i32 : i32, i32
  }
  func.func @transform_3(%arg0: i32, %arg1: i32) -> (i32, i32) {
    %c0_i32 = arith.constant 0 : i32
    return %arg0, %arg1 : i32, i32
  }
}

</mosaic_0001>

<llo_original>
// kernel: tpu_custom_call.1
$region0: #{tpu_custom_call.1}
  #allocation0 [shape = 'u32[]', space=smem, size = 0x4, offset = 0x4, fixed_abs, tag = 'smem constant byte address 0x4 - core index']
  #allocation1 [shape = 'u32[144,128]{1,0:T(1,128)}', space=vmem, size = 0x12000, scoped, tag = 'internal scratch']
  %s0 = inlined_call_operand.vmem [shape: f32[8,256], index: 0, kind: input, shape index: {}]
  %s1 = inlined_call_operand.vmem [shape: f32[8,1], index: 1, kind: input, shape index: {}]
  %s2 = inlined_call_operand.vmem [shape: f32[8,1], index: 2, kind: input, shape index: {}]
  %s3 = inlined_call_operand.hbm [shape: f32[8,256], index: 3, kind: output, shape index: {}]
  %s4 = sld [smem:[#allocation0]]
  $region22: #{tpu_custom_call.1} parent=0
    _
  %s6 = ssub.s32 1, %s4
  %s7 = scalar_select 0, %s6, %s4
  $region1: #{tpu_custom_call.1} parent=0
    #allocation2 [shape = 'u8[8192]{0}', space=vmem, size = 0x2000, scoped, tag = 'output window, operand 0, single buffered']
    #allocation3 [shape = 's32[1]{0}', space=sflag, size = 0x4, scoped, tag = 'scoped memory for tpu_custom_call.1']
    %8 = vsyncpa [#allocation3], 0
    // Predicated region
    $region2: #{tpu_custom_call.1} parent=1 // pred_check
      _
    $region3: #{tpu_custom_call.1} parent=1 // pred_check_branch
      %10 = sbr.rel (0) target = $region5
    $region4: #{tpu_custom_call.1} parent=1 // pred_region
      _
    $region5: #{tpu_custom_call.1} parent=1 // pred_fallthru
      _
    // Predicated region
    $region6: #{tpu_custom_call.1} parent=1 // pred_check
      _
    $region7: #{tpu_custom_call.1} parent=1 // pred_check_branch
      %12 = sbr.rel (0) target = $region9
    $region8: #{tpu_custom_call.1} parent=1 // pred_region
      _
    $region9: #{tpu_custom_call.1} parent=1 // pred_fallthru
      _
    // Predicated region
    $region10: #{tpu_custom_call.1} parent=1 // pred_check
      _
    $region11: #{tpu_custom_call.1} parent=1 // pred_check_branch
      %14 = sbr.rel (0) target = $region13
    $region12: #{tpu_custom_call.1} parent=1 // pred_region
      _
    $region13: #{tpu_custom_call.1} parent=1 // pred_fallthru
      _
    %v15 = vld [vmem:[%s0] sm:$0xff]
    %v16 = vld [vmem:[%s0 + $0x8] sm:$0xff]
    %v17 = vld [vmem:[%s1] sm:$0xff]
    %19 = vset.pattern.permute.xlu0 0
    %20 = vperm.xlu0 %19, %v17
    %v21 = vpop.permute.xlu0 %20
    %v23 = vmul.f32 %v15, %v21
    %v24 = vmul.f32 %v16, %v21
    %v25 = vld [vmem:[%s2] sm:$0xff]
    %27 = vset.pattern.permute.xlu0 0
    %28 = vperm.xlu0 %27, %v25
    %v29 = vpop.permute.xlu0 %28
    %v31 = vadd.f32 %v23, %v29
    %v32 = vadd.f32 %v24, %v29
    %33 = vst [vmem:[#allocation2] sm:$0xff] %v31
    %34 = vst [vmem:[#allocation2 + $0x8] sm:$0xff] %v32
    // Predicated region
    $region14: #{tpu_custom_call.1} parent=1 // pred_check
      _
    $region15: #{tpu_custom_call.1} parent=1 // pred_check_branch
      %36 = sbr.rel (0) target = $region17
    $region16: #{tpu_custom_call.1} parent=1 // pred_region
      %s38 = ssub.s32 256, 256
      %39 = vsyncadd [#allocation3], %s38
      %s41 = sshll.u32 [#allocation2], 4
      %s42 = int_to_ptr.vmem [resolvable:$true] %s41
      %44 = dma.vmem_to_hbm [thread:$0]  %s42, 256, %s3, [#allocation3]
    $region17: #{tpu_custom_call.1} parent=1 // pred_fallthru
      _
    // Predicated region
    $region18: #{tpu_custom_call.1} parent=1 // pred_check
      _
    $region19: #{tpu_custom_call.1} parent=1 // pred_check_branch
      %46 = sbr.rel (0) target = $region21
    $region20: #{tpu_custom_call.1} parent=1 // pred_region
      %47 = dma.done [#allocation3], 256
    $region21: #{tpu_custom_call.1} parent=1 // pred_fallthru
      _
    %48 = vsyncpa [#allocation3], 1

</llo_original>
